<compile_context>
chip_gen: v7x
topology: tpu7x:2x2x1
jax: 0.10.0
libtpu: 0.0.40
codegen_flags: <defaults>
</compile_context>

<pallas_src>
import functools

import jax
import jax.numpy as jnp
import numpy as np
from jax import lax
from jax.experimental import pallas as pl
from jax.experimental.pallas import tpu as pltpu

LANE = 128
MAX_TILE_ROWS = 2048    # (2048,128) f32 tile = 1 MiB; 2 inputs x 2 buffers = 4 MiB VMEM
NUM_CORE_SPLIT = 2      # leading "parallel" grid axis (megacore on v7x; no-op elsewhere)


def _round_up(x, m):
    return ((x + m - 1) // m) * m


def _dice_kernel(clf_ref, tgt_ref, neg_ref, pos_ref, n_ref, *,
                 thresh, rows, tile_rows, tiles_per_core, mask_needed):
    c = pl.program_id(0)   # core-split axis ("parallel")
    i = pl.program_id(1)   # reduction axis over row tiles ("arbitrary")

    # Zero this core's partial-sum blocks at the start of its reduction loop.
    @pl.when(i == 0)
    def _init():
        neg_ref[...] = jnp.zeros_like(neg_ref)
        pos_ref[...] = jnp.zeros_like(pos_ref)
        n_ref[...] = jnp.zeros_like(n_ref)

    clf = clf_ref[...].astype(jnp.float32)
    tgt = tgt_ref[...].astype(jnp.float32)

    if mask_needed:
        # Mask rows past the logical end (partial last tile and/or clamped
        # duplicated tiles on the second core).  Zeroing both clf and tgt makes
        # those elements contribute nothing to any of the three sums.
        start_row = (c * tiles_per_core + i) * tile_rows
        row_idx = lax.broadcasted_iota(jnp.int32, (tile_rows, LANE), 0)
        valid = (start_row + row_idx) < rows
        clf = jnp.where(valid, clf, 0.0)
        tgt = jnp.where(valid, tgt, 0.0)

    # negatives: targets == 0, values below thresh zeroed (torch in-place fill)
    neg_vals = jnp.where(jnp.logical_and(tgt == 0.0, clf >= thresh), clf, 0.0)
    # positives: targets == 1
    pos_vals = jnp.where(tgt == 1.0, clf, 0.0)

    # Reduce the (tile_rows, 128) tile to a vreg-shaped (8, 128) partial using
    # pure VPU adds; the single XLU reduce happens once, in the wrapper.
    def tile_partial(v):
        return jnp.sum(v.reshape(-1, 8, LANE), axis=0)

    neg_ref[...] += tile_partial(neg_vals)
    pos_ref[...] += tile_partial(pos_vals)
    n_ref[...] += tile_partial(tgt)


def dice_loss(classifications, targets, laplace=1e-5, thresh=0.2):
    # NOTE: `laplace` is a module attribute but is unused in the original forward.
    del laplace
    thresh = float(thresh)

    # Stream native dtypes (no wrapper astype); reshape(-1) is free.
    clf = classifications.reshape(-1)
    tgt = targets.reshape(-1)
    n_elems = clf.shape[0]
    if n_elems == 0:
        return jnp.float32(0.0)  # 1 - thresh/thresh

    # Lane alignment: only needed when n_elems % 128 != 0.  Zero padding is exact
    # (clf=0 adds 0 to the neg sum even if kept; tgt=0 adds nothing to n / pos).
    if n_elems % LANE:
        pad = LANE - n_elems % LANE
        clf = jnp.pad(clf, (0, pad))
        tgt = jnp.pad(tgt, (0, pad))

    clf2 = clf.reshape(-1, LANE)
    tgt2 = tgt.reshape(-1, LANE)
    rows = clf2.shape[0]

    tile_rows = min(MAX_TILE_ROWS, _round_up(rows, 8))
    num_tiles = (rows + tile_rows - 1) // tile_rows
    num_split = min(NUM_CORE_SPLIT, num_tiles)
    tiles_per_core = (num_tiles + num_split - 1) // num_split
    mask_needed = (rows % tile_rows != 0) or (num_tiles % num_split != 0)

    def in_index_map(c, i):
        t = c * tiles_per_core + i
        if num_tiles % num_split != 0:
            # Clamp so the DMA never leaves the array; duplicated tiles are
            # fully masked out in-kernel.
            t = jnp.minimum(t, num_tiles - 1)
        return (t, 0)

    in_spec = pl.BlockSpec((tile_rows, LANE), in_index_map)
    out_spec = pl.BlockSpec((None, 8, LANE), lambda c, i: (c, 0, 0))
    part_shape = jax.ShapeDtypeStruct((num_split, 8, LANE), jnp.float32)

    kernel = functools.partial(
        _dice_kernel, thresh=thresh, rows=rows, tile_rows=tile_rows,
        tiles_per_core=tiles_per_core, mask_needed=mask_needed)

    neg_p, pos_p, n_p = pl.pallas_call(
        kernel,
        out_shape=(part_shape, part_shape, part_shape),
        grid_spec=pltpu.PrefetchScalarGridSpec(
            num_scalar_prefetch=0,
            grid=(num_split, tiles_per_core),
            in_specs=[in_spec, in_spec],
            out_specs=(out_spec, out_spec, out_spec),
        ),
        compiler_params=pltpu.CompilerParams(
            dimension_semantics=("parallel", "arbitrary")),
    )(clf2, tgt2)

    # Tiny final combine (num_split x 8 x 128 floats per quantity) + dice formula.
    neg = jnp.sum(neg_p)
    pos = jnp.sum(pos_p)
    n = jnp.sum(n_p)
    clf_pos = jnp.where(n > 0.0, pos, 0.0)
    return 1.0 - (2.0 * clf_pos + thresh) / (clf_pos + neg + n + thresh)


def _reference_dice(classifications, targets, thresh=0.2):
    clf = np.asarray(classifications, dtype=np.float32).reshape(-1)
    tgt = np.asarray(targets, dtype=np.float32).reshape(-1)
    clf_neg = clf[tgt == 0].copy()
    clf_neg[clf_neg < thresh] = 0.0
    n = tgt.sum()
    clf_pos = clf[tgt == 1].sum() if n > 0 else 0.0
    return 1.0 - (2.0 * clf_pos + thresh) / (clf_pos + clf_neg.sum() + n + thresh)


if __name__ == "__main__":
    key = jax.random.PRNGKey(0)
    k1, k2 = jax.random.split(key)

    # classifications: sigmoid-like scores in [0, 1); targets: binary mask {0, 1}
    classifications = jax.random.uniform(k1, (2, 4, 16, 16), dtype=jnp.float32)
    targets = (jax.random.uniform(k2, (2, 4, 16, 16)) > 0.8).astype(jnp.float32)

    dice = dice_loss(classifications, targets, laplace=1e-5, thresh=0.2)
    dice = jax.block_until_ready(dice)

    ref = _reference_dice(classifications, targets, thresh=0.2)
    assert np.isclose(float(dice), float(ref), rtol=1e-5, atol=1e-5), (float(dice), float(ref))

    print("KERNEL_OK")
</pallas_src>

<mosaic_0001>
module attributes {stable_mosaic.version = 11 : i64} {
  func.func @_dice_kernel(%arg0: i32, %arg1: i32, %arg2: memref<16x128xf32, #tpu.memory_space<vmem>>, %arg3: memref<16x128xf32, #tpu.memory_space<vmem>>, %arg4: memref<1x8x128xf32, #tpu.memory_space<vmem>>, %arg5: memref<1x8x128xf32, #tpu.memory_space<vmem>>, %arg6: memref<1x8x128xf32, #tpu.memory_space<vmem>>) attributes {dimension_semantics = [#tpu.dimension_semantics<parallel>, #tpu.dimension_semantics<arbitrary>], iteration_bounds = array<i64: 1, 1>, scalar_prefetch = 0 : i64, scratch_operands = 0 : i64, tpu.core_type = #tpu.core_type<tc>, window_params = [{transform_indices = @transform_0, window_bounds = array<i64: 16, 128>}, {transform_indices = @transform_1, window_bounds = array<i64: 16, 128>}, {transform_indices = @transform_2, window_bounds = array<i64: 1, 8, 128>}, {transform_indices = @transform_3, window_bounds = array<i64: 1, 8, 128>}, {transform_indices = @transform_4, window_bounds = array<i64: 1, 8, 128>}]} {
    %c0_i32 = arith.constant 0 : i32
    %0 = arith.cmpi eq, %arg1, %c0_i32 : i32
    %1 = arith.extui %0 : i1 to i32
    %c0_i32_0 = arith.constant 0 : i32
    %2 = arith.cmpi ne, %1, %c0_i32_0 : i32
    scf.if %2 {
      %cst_29 = arith.constant 0.000000e+00 : f32
      %40 = vector.broadcast %cst_29 : f32 to vector<8x128xf32>
      %c0_30 = arith.constant 0 : index
      %c0_31 = arith.constant 0 : index
      %c0_32 = arith.constant 0 : index
      %41 = vector.load %arg4[%c0_30, %c0_31, %c0_32] : memref<1x8x128xf32, #tpu.memory_space<vmem>>, vector<1x8x128xf32>
      %42 = vector.shape_cast %41 : vector<1x8x128xf32> to vector<8x128xf32>
      %43 = vector.shape_cast %40 : vector<8x128xf32> to vector<1x8x128xf32>
      tpu.vector_store %arg4[%c0_30, %c0_31, %c0_32], %43 {strides = array<i32>} : memref<1x8x128xf32, #tpu.memory_space<vmem>>, vector<1x8x128xf32>,
      %cst_33 = arith.constant 0.000000e+00 : f32
      %44 = vector.broadcast %cst_33 : f32 to vector<8x128xf32>
      %c0_34 = arith.constant 0 : index
      %c0_35 = arith.constant 0 : index
      %c0_36 = arith.constant 0 : index
      %45 = vector.load %arg5[%c0_34, %c0_35, %c0_36] : memref<1x8x128xf32, #tpu.memory_space<vmem>>, vector<1x8x128xf32>
      %46 = vector.shape_cast %45 : vector<1x8x128xf32> to vector<8x128xf32>
      %47 = vector.shape_cast %44 : vector<8x128xf32> to vector<1x8x128xf32>
      tpu.vector_store %arg5[%c0_34, %c0_35, %c0_36], %47 {strides = array<i32>} : memref<1x8x128xf32, #tpu.memory_space<vmem>>, vector<1x8x128xf32>,
      %cst_37 = arith.constant 0.000000e+00 : f32
      %48 = vector.broadcast %cst_37 : f32 to vector<8x128xf32>
      %c0_38 = arith.constant 0 : index
      %c0_39 = arith.constant 0 : index
      %c0_40 = arith.constant 0 : index
      %49 = vector.load %arg6[%c0_38, %c0_39, %c0_40] : memref<1x8x128xf32, #tpu.memory_space<vmem>>, vector<1x8x128xf32>
      %50 = vector.shape_cast %49 : vector<1x8x128xf32> to vector<8x128xf32>
      %51 = vector.shape_cast %48 : vector<8x128xf32> to vector<1x8x128xf32>
      tpu.vector_store %arg6[%c0_38, %c0_39, %c0_40], %51 {strides = array<i32>} : memref<1x8x128xf32, #tpu.memory_space<vmem>>, vector<1x8x128xf32>,
    } else {
    }
    %c0 = arith.constant 0 : index
    %c0_1 = arith.constant 0 : index
    %3 = vector.load %arg2[%c0, %c0_1] : memref<16x128xf32, #tpu.memory_space<vmem>>, vector<16x128xf32>
    %c0_2 = arith.constant 0 : index
    %c0_3 = arith.constant 0 : index
    %4 = vector.load %arg3[%c0_2, %c0_3] : memref<16x128xf32, #tpu.memory_space<vmem>>, vector<16x128xf32>
    %cst = arith.constant 0.000000e+00 : f32
    %5 = vector.broadcast %cst : f32 to vector<16x128xf32>
    %6 = arith.cmpf oeq, %4, %5 : vector<16x128xf32>
    %cst_4 = arith.constant 2.000000e-01 : f32
    %7 = vector.broadcast %cst_4 : f32 to vector<16x128xf32>
    %8 = arith.cmpf oge, %3, %7 : vector<16x128xf32>
    %9 = arith.andi %6, %8 : vector<16x128xi1>
    %cst_5 = arith.constant 0.000000e+00 : f32
    %10 = vector.broadcast %cst_5 : f32 to vector<16x128xf32>
    %11 = arith.select %9, %3, %10 : vector<16x128xi1>, vector<16x128xf32>
    %cst_6 = arith.constant 1.000000e+00 : f32
    %12 = vector.broadcast %cst_6 : f32 to vector<16x128xf32>
    %13 = arith.cmpf oeq, %4, %12 : vector<16x128xf32>
    %cst_7 = arith.constant 0.000000e+00 : f32
    %14 = vector.broadcast %cst_7 : f32 to vector<16x128xf32>
    %15 = arith.select %13, %3, %14 : vector<16x128xi1>, vector<16x128xf32>
    %c0_8 = arith.constant 0 : index
    %c0_9 = arith.constant 0 : index
    %c0_10 = arith.constant 0 : index
    %16 = vector.load %arg4[%c0_8, %c0_9, %c0_10] : memref<1x8x128xf32, #tpu.memory_space<vmem>>, vector<1x8x128xf32>
    %17 = vector.shape_cast %16 : vector<1x8x128xf32> to vector<8x128xf32>
    %18 = vector.shape_cast %11 : vector<16x128xf32> to vector<2x8x128xf32>
    %cst_11 = arith.constant dense<0.000000e+00> : vector<8x128xf32>
    %19 = vector.multi_reduction <add>, %18, %cst_11 [0] : vector<2x8x128xf32> to vector<8x128xf32>
    %20 = arith.addf %17, %19 : vector<8x128xf32>
    %c0_12 = arith.constant 0 : index
    %c0_13 = arith.constant 0 : index
    %c0_14 = arith.constant 0 : index
    %21 = vector.load %arg4[%c0_12, %c0_13, %c0_14] : memref<1x8x128xf32, #tpu.memory_space<vmem>>, vector<1x8x128xf32>
    %22 = vector.shape_cast %21 : vector<1x8x128xf32> to vector<8x128xf32>
    %23 = vector.shape_cast %20 : vector<8x128xf32> to vector<1x8x128xf32>
    tpu.vector_store %arg4[%c0_12, %c0_13, %c0_14], %23 {strides = array<i32>} : memref<1x8x128xf32, #tpu.memory_space<vmem>>, vector<1x8x128xf32>,
    %c0_15 = arith.constant 0 : index
    %c0_16 = arith.constant 0 : index
    %c0_17 = arith.constant 0 : index
    %24 = vector.load %arg5[%c0_15, %c0_16, %c0_17] : memref<1x8x128xf32, #tpu.memory_space<vmem>>, vector<1x8x128xf32>
    %25 = vector.shape_cast %24 : vector<1x8x128xf32> to vector<8x128xf32>
    %26 = vector.shape_cast %15 : vector<16x128xf32> to vector<2x8x128xf32>
    %cst_18 = arith.constant dense<0.000000e+00> : vector<8x128xf32>
    %27 = vector.multi_reduction <add>, %26, %cst_18 [0] : vector<2x8x128xf32> to vector<8x128xf32>
    %28 = arith.addf %25, %27 : vector<8x128xf32>
    %c0_19 = arith.constant 0 : index
    %c0_20 = arith.constant 0 : index
    %c0_21 = arith.constant 0 : index
    %29 = vector.load %arg5[%c0_19, %c0_20, %c0_21] : memref<1x8x128xf32, #tpu.memory_space<vmem>>, vector<1x8x128xf32>
    %30 = vector.shape_cast %29 : vector<1x8x128xf32> to vector<8x128xf32>
    %31 = vector.shape_cast %28 : vector<8x128xf32> to vector<1x8x128xf32>
    tpu.vector_store %arg5[%c0_19, %c0_20, %c0_21], %31 {strides = array<i32>} : memref<1x8x128xf32, #tpu.memory_space<vmem>>, vector<1x8x128xf32>,
    %c0_22 = arith.constant 0 : index
    %c0_23 = arith.constant 0 : index
    %c0_24 = arith.constant 0 : index
    %32 = vector.load %arg6[%c0_22, %c0_23, %c0_24] : memref<1x8x128xf32, #tpu.memory_space<vmem>>, vector<1x8x128xf32>
    %33 = vector.shape_cast %32 : vector<1x8x128xf32> to vector<8x128xf32>
    %34 = vector.shape_cast %4 : vector<16x128xf32> to vector<2x8x128xf32>
    %cst_25 = arith.constant dense<0.000000e+00> : vector<8x128xf32>
    %35 = vector.multi_reduction <add>, %34, %cst_25 [0] : vector<2x8x128xf32> to vector<8x128xf32>
    %36 = arith.addf %33, %35 : vector<8x128xf32>
    %c0_26 = arith.constant 0 : index
    %c0_27 = arith.constant 0 : index
    %c0_28 = arith.constant 0 : index
    %37 = vector.load %arg6[%c0_26, %c0_27, %c0_28] : memref<1x8x128xf32, #tpu.memory_space<vmem>>, vector<1x8x128xf32>
    %38 = vector.shape_cast %37 : vector<1x8x128xf32> to vector<8x128xf32>
    %39 = vector.shape_cast %36 : vector<8x128xf32> to vector<1x8x128xf32>
    tpu.vector_store %arg6[%c0_26, %c0_27, %c0_28], %39 {strides = array<i32>} : memref<1x8x128xf32, #tpu.memory_space<vmem>>, vector<1x8x128xf32>,
    return
  }
  func.func @transform_0(%arg0: i32, %arg1: i32) -> (i32, i32) {
    %c1_i32 = arith.constant 1 : i32
    %0 = arith.muli %arg0, %c1_i32 : i32
    %1 = arith.addi %0, %arg1 : i32
    %c0_i32 = arith.constant 0 : i32
    %c0_i32_0 = arith.constant 0 : i32
    return %1, %c0_i32 : i32, i32
  }
  func.func @transform_1(%arg0: i32, %arg1: i32) -> (i32, i32) {
    %c1_i32 = arith.constant 1 : i32
    %0 = arith.muli %arg0, %c1_i32 : i32
    %1 = arith.addi %0, %arg1 : i32
    %c0_i32 = arith.constant 0 : i32
    %c0_i32_0 = arith.constant 0 : i32
    return %1, %c0_i32 : i32, i32
  }
  func.func @transform_2(%arg0: i32, %arg1: i32) -> (i32, i32, i32) {
    %c0_i32 = arith.constant 0 : i32
    %c0_i32_0 = arith.constant 0 : i32
    %c0_i32_1 = arith.constant 0 : i32
    return %arg0, %c0_i32, %c0_i32_0 : i32, i32, i32
  }
  func.func @transform_3(%arg0: i32, %arg1: i32) -> (i32, i32, i32) {
    %c0_i32 = arith.constant 0 : i32
    %c0_i32_0 = arith.constant 0 : i32
    %c0_i32_1 = arith.constant 0 : i32
    return %arg0, %c0_i32, %c0_i32_0 : i32, i32, i32
  }
  func.func @transform_4(%arg0: i32, %arg1: i32) -> (i32, i32, i32) {
    %c0_i32 = arith.constant 0 : i32
    %c0_i32_0 = arith.constant 0 : i32
    %c0_i32_1 = arith.constant 0 : i32
    return %arg0, %c0_i32, %c0_i32_0 : i32, i32, i32
  }
}

</mosaic_0001>

<llo_original>
// kernel: tpu_custom_call.1
$region0: #{tpu_custom_call.1}
  #allocation0 [shape = 'u32[]', space=smem, size = 0x4, offset = 0x4, fixed_abs, tag = 'smem constant byte address 0x4 - core index']
  #allocation1 [shape = 'u32[144,128]{1,0:T(1,128)}', space=vmem, size = 0x12000, scoped, tag = 'internal scratch']
  %s0 = inlined_call_operand.hbm [shape: f32[16,128], index: 0, kind: input, shape index: {}]
  %s1 = inlined_call_operand.hbm [shape: f32[16,128], index: 1, kind: input, shape index: {}]
  %s2 = inlined_call_operand.hbm [shape: f32[1,8,128], index: 2, kind: output, shape index: {0}]
  %s3 = inlined_call_operand.hbm [shape: f32[1,8,128], index: 3, kind: output, shape index: {1}]
  %s4 = inlined_call_operand.hbm [shape: f32[1,8,128], index: 4, kind: output, shape index: {2}]
  %5 = xla_tuple %s2, %s3, %s4
  %s6 = sld [smem:[#allocation0]]
  $region46: #{tpu_custom_call.1} parent=0
    _
  %s8 = ssub.s32 1, %s6
  %s9 = scalar_select 0, %s8, %s6
  $region1: #{tpu_custom_call.1} parent=0
    #allocation2 [shape = 'u8[8192]{0}', space=vmem, size = 0x2000, scoped, tag = 'input window, operand 0, single buffered']
    #allocation3 [shape = 's32[1]{0}', space=sflag, size = 0x4, scoped, tag = 'scoped memory for tpu_custom_call.1']
    #allocation4 [shape = 's32[1]{0}', space=sflag, size = 0x4, scoped, tag = 'scoped memory for tpu_custom_call.1']
    #allocation5 [shape = 'u8[8192]{0}', space=vmem, size = 0x2000, scoped, tag = 'input window, operand 1, single buffered']
    #allocation6 [shape = 's32[1]{0}', space=sflag, size = 0x4, scoped, tag = 'scoped memory for tpu_custom_call.1']
    #allocation7 [shape = 'u8[4096]{0}', space=vmem, size = 0x1000, scoped, tag = 'output window, operand 0, single buffered']
    #allocation8 [shape = 'u8[4096]{0}', space=vmem, size = 0x1000, scoped, tag = 'output window, operand 1, single buffered']
    #allocation9 [shape = 's32[1]{0}', space=sflag, size = 0x4, scoped, tag = 'scoped memory for tpu_custom_call.1']
    #allocation10 [shape = 'u8[4096]{0}', space=vmem, size = 0x1000, scoped, tag = 'output window, operand 2, single buffered']
    %10 = vsyncpa [#allocation3], 0
    %11 = vsyncpa [#allocation6], 0
    %12 = vsyncpa [#allocation4], 0
    %13 = vsyncpa [#allocation9], 0
    // Predicated region
    $region2: #{tpu_custom_call.1} parent=1 // pred_check
      _
    $region3: #{tpu_custom_call.1} parent=1 // pred_check_branch
      %15 = sbr.rel (0) target = $region5
    $region4: #{tpu_custom_call.1} parent=1 // pred_region
      %s16 = sadd.s32 0, 0
      %s17 = smul.u32 2, %s16
      %s19 = ssub.s32 256, 256
      %20 = vsyncadd [#allocation3], %s19
      %s21 = smul.addr %s17, 128
      %s22 = scalar_lea.hbm %s0, %s21
      %s23 = sshll.u32 [#allocation2], 4
      %s24 = int_to_ptr.vmem [resolvable:$true] %s23
      %29 = dma.hbm_to_vmem [thread:$0]  %s22, 256, %s24, [#allocation3], 128, 128, 8
    $region5: #{tpu_custom_call.1} parent=1 // pred_fallthru
      _
    // Predicated region
    $region6: #{tpu_custom_call.1} parent=1 // pred_check
      _
    $region7: #{tpu_custom_call.1} parent=1 // pred_check_branch
      %31 = sbr.rel (0) target = $region9
    $region8: #{tpu_custom_call.1} parent=1 // pred_region
      %s32 = sadd.s32 0, 0
      %s33 = smul.u32 2, %s32
      %s35 = ssub.s32 256, 256
      %36 = vsyncadd [#allocation6], %s35
      %s37 = smul.addr %s33, 128
      %s38 = scalar_lea.hbm %s1, %s37
      %s39 = sshll.u32 [#allocation5], 4
      %s40 = int_to_ptr.vmem [resolvable:$true] %s39
      %45 = dma.hbm_to_vmem [thread:$0]  %s38, 256, %s40, [#allocation6], 128, 128, 8
    $region9: #{tpu_custom_call.1} parent=1 // pred_fallthru
      _
    // Predicated region
    $region10: #{tpu_custom_call.1} parent=1 // pred_check
      _
    $region11: #{tpu_custom_call.1} parent=1 // pred_check_branch
      %47 = sbr.rel (0) target = $region13
    $region12: #{tpu_custom_call.1} parent=1 // pred_region
      %48 = dma.done [#allocation3], 256
    $region13: #{tpu_custom_call.1} parent=1 // pred_fallthru
      _
    // Predicated region
    $region14: #{tpu_custom_call.1} parent=1 // pred_check
      _
    $region15: #{tpu_custom_call.1} parent=1 // pred_check_branch
      %50 = sbr.rel (0) target = $region17
    $region16: #{tpu_custom_call.1} parent=1 // pred_region
      %51 = dma.done [#allocation6], 256
    $region17: #{tpu_custom_call.1} parent=1 // pred_fallthru
      _
    %s52 = sadd.s32 0, 0
    %s53 = smul.u32 2, %s52
    %s54 = sadd.s32 0, 0
    %s55 = smul.u32 2, %s54
    %p56 = scmp.eq.s32.totalorder 0, 0
    // Predicated region
    $region18: #{tpu_custom_call.1} parent=1 // pred_check
      %p57 = pneg %p56
    $region19: #{tpu_custom_call.1} parent=1 // pred_check_branch
      %59 = sbr.rel (%p57) target = $region21
    $region20: #{tpu_custom_call.1} parent=1 // pred_region
      %60 = vst [vmem:[#allocation7] sm:$0xff] 0.0
      %61 = vst [vmem:[#allocation8] sm:$0xff] 0.0
      %62 = vst [vmem:[#allocation10] sm:$0xff] 0.0
    $region21: #{tpu_custom_call.1} parent=1 // pred_fallthru
      _
    %v63 = vld [vmem:[#allocation2] sm:$0xff]
    %v64 = vld [vmem:[#allocation2 + $0x8] sm:$0xff]
    %v65 = vld [vmem:[#allocation5] sm:$0xff]
    %v66 = vld [vmem:[#allocation5 + $0x8] sm:$0xff]
    %vm67 = vcmp.eq.f32.partialorder %v65, 0.0
    %vm68 = vcmp.eq.f32.partialorder %v66, 0.0
    %vm69 = vcmp.ge.f32.partialorder %v63, 0.2
    %vm70 = vcmp.ge.f32.partialorder %v64, 0.2
    %vm71 = vmand %vm67, %vm69
    %vm72 = vmand %vm68, %vm70
    %v73 = vsel %vm71, %v63, 0.0
    %v74 = vsel %vm72, %v64, 0.0
    %vm75 = vcmp.eq.f32.partialorder %v65, 1.0
    %vm76 = vcmp.eq.f32.partialorder %v66, 1.0
    %v77 = vsel %vm75, %v63, 0.0
    %v78 = vsel %vm76, %v64, 0.0
    %v79 = vld [vmem:[#allocation7] sm:$0xff]
    %v80 = vadd.f32 %v73, %v74
    %v81 = vadd.f32 %v79, %v80
    %82 = vst [vmem:[#allocation7] sm:$0xff] %v81
    %v83 = vld [vmem:[#allocation8] sm:$0xff]
    %v84 = vadd.f32 %v77, %v78
    %v85 = vadd.f32 %v83, %v84
    %86 = vst [vmem:[#allocation8] sm:$0xff] %v85
    %v87 = vld [vmem:[#allocation10] sm:$0xff]
    %v88 = vadd.f32 %v65, %v66
    %v89 = vadd.f32 %v87, %v88
    %90 = vst [vmem:[#allocation10] sm:$0xff] %v89
    // Predicated region
    $region22: #{tpu_custom_call.1} parent=1 // pred_check
      _
    $region23: #{tpu_custom_call.1} parent=1 // pred_check_branch
      %92 = sbr.rel (0) target = $region25
    $region24: #{tpu_custom_call.1} parent=1 // pred_region
      %s94 = ssub.s32 128, 128
      %95 = vsyncadd [#allocation4], %s94
      %s97 = sshll.u32 [#allocation7], 4
      %s98 = int_to_ptr.vmem [resolvable:$true] %s97
      %100 = dma.vmem_to_hbm [thread:$0]  %s98, 128, %s2, [#allocation4]
    $region25: #{tpu_custom_call.1} parent=1 // pred_fallthru
      _
    // Predicated region
    $region26: #{tpu_custom_call.1} parent=1 // pred_check
      _
    $region27: #{tpu_custom_call.1} parent=1 // pred_check_branch
      %102 = sbr.rel (0) target = $region29
    $region28: #{tpu_custom_call.1} parent=1 // pred_region
      %s104 = ssub.s32 128, 128
      %105 = vsyncadd [#allocation9], %s104
      %s107 = sshll.u32 [#allocation8], 4
      %s108 = int_to_ptr.vmem [resolvable:$true] %s107
      %110 = dma.vmem_to_hbm [thread:$0]  %s108, 128, %s3, [#allocation9]
    $region29: #{tpu_custom_call.1} parent=1 // pred_fallthru
      _
    // Predicated region
    $region30: #{tpu_custom_call.1} parent=1 // pred_check
      _
    $region31: #{tpu_custom_call.1} parent=1 // pred_check_branch
      %112 = sbr.rel (0) target = $region33
    $region32: #{tpu_custom_call.1} parent=1 // pred_region
      %s114 = ssub.s32 128, 128
      %115 = vsyncadd [#allocation9], %s114
      %s117 = sshll.u32 [#allocation10], 4
      %s118 = int_to_ptr.vmem [resolvable:$true] %s117
      %120 = dma.vmem_to_hbm [thread:$0]  %s118, 128, %s4, [#allocation9]
    $region33: #{tpu_custom_call.1} parent=1 // pred_fallthru
      _
    // Predicated region
    $region34: #{tpu_custom_call.1} parent=1 // pred_check
      _
    $region35: #{tpu_custom_call.1} parent=1 // pred_check_branch
      %122 = sbr.rel (0) target = $region37
    $region36: #{tpu_custom_call.1} parent=1 // pred_region
      %123 = dma.done [#allocation4], 128
    $region37: #{tpu_custom_call.1} parent=1 // pred_fallthru
      _
    // Predicated region
    $region38: #{tpu_custom_call.1} parent=1 // pred_check
      _
    $region39: #{tpu_custom_call.1} parent=1 // pred_check_branch
      %125 = sbr.rel (0) target = $region41
    $region40: #{tpu_custom_call.1} parent=1 // pred_region
      %126 = dma.done [#allocation9], 128
    $region41: #{tpu_custom_call.1} parent=1 // pred_fallthru
      _
    // Predicated region
    $region42: #{tpu_custom_call.1} parent=1 // pred_check
      _
    $region43: #{tpu_custom_call.1} parent=1 // pred_check_branch
      %128 = sbr.rel (0) target = $region45
    $region44: #{tpu_custom_call.1} parent=1 // pred_region
      %129 = dma.done [#allocation9], 128
    $region45: #{tpu_custom_call.1} parent=1 // pred_fallthru
      _
    %130 = vsyncpa [#allocation3], 1
    %131 = vsyncpa [#allocation6], 1
    %132 = vsyncpa [#allocation4], 1
    %133 = vsyncpa [#allocation9], 1

</llo_original>
